<compile_context>
chip_gen: v7x
topology: tpu7x:2x2x1
jax: 0.10.0
libtpu: 0.0.40
codegen_flags: <defaults>
</compile_context>

<pallas_src>
import functools

import numpy as np
import jax
import jax.numpy as jnp
from jax import lax
from jax.experimental import pallas as pl
from jax.experimental.pallas import tpu as pltpu

P = 10  # matches `p = 10` in the reference script


def _spodnet_kernel(r_ref, w0_ref, diag_ref, w_scr, *, num_k, gy, num_sub):
    """One batch block (num_sub * 128 lanes) of the full K-pass SpodNet forward.

    r_ref    : (K*P*P,) SMEM, r_ref[(k*P + col)*P + j] = theta_12_next[k, col][j]
               (zero at j == col).
    w0_ref   : (P, P, num_sub*128) VMEM, W0[j, i, b] (symmetric), batch on lanes.
    diag_ref : (P, num_sub*128) VMEM output, last-pass Theta diagonal per lane.
    w_scr    : (P, P, 128) VMEM scratch, running W for the current 128-lane slice.
    """
    Pn = w0_ref.shape[0]
    Bc = w_scr.shape[-1]
    dt = diag_ref.dtype
    gy_c = jnp.asarray(gy, dt)

    sub_iota = lax.broadcasted_iota(jnp.int32, (Pn, 1), 0)  # sublane index, (P,1)

    for sub in range(num_sub):  # static 128-lane sub-slices of the lane block
        lo = sub * Bc
        w_scr[...] = w0_ref[:, :, lo:lo + Bc]              # W state <- W0
        diag_ref[:, lo:lo + Bc] = jnp.zeros((Pn, Bc), dt)  # diag accumulator

        def k_body(k, carry):
            def col_body(col, inner):
                e = (sub_iota == col).astype(dt)           # (P,1) one-hot at `col`
                rbase = (k * Pn + col) * Pn

                # Load every W row once; wr = W @ r via scalar-splat mul-adds
                # (r[col] == 0, so the j == col term vanishes exactly).
                w_rows = []
                wr = jnp.zeros((Pn, Bc), dt)
                for j in range(Pn):
                    wj = w_scr[j]
                    w_rows.append(wj)
                    wr = wr + wj * r_ref[rbase + j]

                w_col = w_scr[col]                                   # row `col`, (P,Bc)
                w22 = jnp.sum(e * w_col, axis=0, keepdims=True)      # (1,Bc)
                inv_w22 = 1.0 / w22
                s_val = jnp.sum(e * wr, axis=0, keepdims=True)       # (1,Bc) = w12 . r

                # u2 = w_col / w22 ;  inv_Theta_11 @ r = wr - s*u2 (row `col` -> 0)
                u2 = inv_w22 * w_col
                mr = wr - s_val * u2
                # w22_next = 1/(theta_22_next - r^T inv_Theta_11 r) = 1/(gy + s^2/w22)
                w22n = 1.0 / (gy_c + s_val * s_val * inv_w22)
                wn = (-w22n) * mr                # w_12_next, already 0 at `col`
                # v2 folds the rank-1 coefficient and the column-`col` fix:
                #   row_j_new = w_row_j - wcol_j*u2 + wn_j*v2
                v2 = w22n * wn + e
                w_col_new = wn + e * w22n        # new row `col`

                for j in range(Pn):
                    w_scr[j] = (w_rows[j]
                                - w_col[j:j + 1, :] * u2
                                + wn[j:j + 1, :] * v2)
                w_scr[col] = w_col_new           # overwrite row `col` once

                # Only the last pass' Theta is observable, and only its diagonal
                # is batch-dependent:  t22n = gy + r^T W_11 r.
                @pl.when(k == num_k - 1)
                def _():
                    schur = jnp.zeros((1, Bc), dt)
                    for j in range(Pn):
                        schur = schur + r_ref[rbase + j] * wr[j:j + 1, :]
                    t22n = gy_c + schur
                    diag_ref[:, lo:lo + Bc] = diag_ref[:, lo:lo + Bc] + e * t22n

                return inner

            return lax.fori_loop(0, Pn, col_body, carry)

        lax.fori_loop(0, num_k, k_body, jnp.int32(0))


def spodnet_forward(theta, r_embedded, *, gy=1.0):
    """theta: (B, P, P) SPD batch; r_embedded: (K, P, P) random theta_12_next rows."""
    B, Pn, _ = theta.shape
    K = r_embedded.shape[0]
    dt = theta.dtype
    if K == 0:
        return theta

    eye = jnp.eye(Pn, dtype=dt)

    # Glue: W0 = inv(Theta), symmetrized so the column updates stay symmetric.
    w0 = jnp.linalg.inv(theta)
    w0 = 0.5 * (w0 + jnp.swapaxes(w0, -1, -2))

    # Lane blocking: up to 512 lanes (4 x 128 sub-slices) per grid step, but
    # keep >= 2 grid steps whenever B > 128 so v7x can use both TensorCores.
    sub_chunks = -(-B // 128)
    num_sub = max(1, min(4, sub_chunks // 2))
    num_chunks = -(-sub_chunks // num_sub)
    block_lanes = num_sub * 128
    Bp = num_chunks * block_lanes

    # Batch-on-lanes relayout (B, P, P) -> (P, P, Bp); padded lanes replicate
    # the last real batch element so they stay finite whenever the real lanes
    # are (they are sliced off afterwards and never mix across lanes).
    w0_l = jnp.transpose(w0, (1, 2, 0))
    if Bp != B:
        w0_l = jnp.pad(w0_l, ((0, 0), (0, 0), (0, Bp - B)), mode="edge")

    # Random vectors as flat SMEM scalars (zero enforced at each column's own
    # position).
    r_flat = (r_embedded.astype(dt) * (1.0 - eye)[None]).reshape(K * Pn * Pn)

    kernel = functools.partial(_spodnet_kernel, num_k=K, gy=gy, num_sub=num_sub)
    diag = pl.pallas_call(
        kernel,
        out_shape=jax.ShapeDtypeStruct((Pn, Bp), dt),
        grid_spec=pltpu.PrefetchScalarGridSpec(
            num_scalar_prefetch=0,
            grid=(num_chunks,),
            in_specs=[
                pl.BlockSpec(memory_space=pltpu.MemorySpace.SMEM),        # r scalars
                pl.BlockSpec((Pn, Pn, block_lanes), lambda c: (0, 0, c)),  # W0 chunk
            ],
            out_specs=pl.BlockSpec((Pn, block_lanes), lambda c: (0, c)),
            scratch_shapes=[pltpu.VMEM((Pn, Pn, 128), dt)],                # W state
        ),
        compiler_params=pltpu.CompilerParams(dimension_semantics=("parallel",)),
    )(r_flat, w0_l)

    diag_b = jnp.transpose(diag[:, :B])  # (B, P) batch-dependent Theta diagonal

    # Final Theta off-diagonals are batch-independent: entry [i, j] (i != j) is
    # the last-pass random vector of column max(i, j) at position min(i, j).
    idx = jnp.arange(Pn)
    mx = jnp.maximum(idx[:, None], idx[None, :])
    mn = jnp.minimum(idx[:, None], idx[None, :])
    r_last = r_embedded[K - 1].astype(dt) * (1.0 - eye)
    off = r_last[mx, mn] * (1.0 - eye)
    return off[None, :, :] + diag_b[:, :, None] * eye[None, :, :]


def spodnet_reference(theta, r_embedded, *, gy=1.0):
    """Pure-JAX reference of the same forward (for validation)."""
    B, Pn, _ = theta.shape
    K = r_embedded.shape[0]
    W = jnp.linalg.inv(theta)
    W = 0.5 * (W + jnp.swapaxes(W, -1, -2))
    Theta = theta
    eye = jnp.eye(Pn, dtype=theta.dtype)
    for k in range(K):
        for col in range(Pn):
            e = eye[col]
            m = 1.0 - e
            mm = m[:, None] * m[None, :]
            ee = e[:, None] * e[None, :]
            r = r_embedded[k, col] * m
            rr = r[:, None] * r[None, :]
            w22 = W[:, col, col][:, None, None]
            w12c = (W[:, :, col] * m)[:, :, None]
            w12r = (W[:, col, :] * m)[:, None, :]
            M = W - (1.0 / w22) * (w12c * w12r)
            schur = jnp.sum(W * rr, axis=(1, 2), keepdims=True)
            t22n = gy + schur
            Theta = (Theta * mm
                     + r[None, :, None] * e[None, None, :]
                     + e[None, :, None] * r[None, None, :]
                     + t22n * ee)
            quad_m = jnp.sum(M * rr, axis=(1, 2), keepdims=True)
            w22n = 1.0 / (t22n - quad_m)
            mrc = jnp.sum(M * r[None, None, :], axis=2, keepdims=True)
            mrr = jnp.sum(M * r[None, :, None], axis=1, keepdims=True)
            wnc = m[None, :, None] * (-w22n) * mrc
            wnr = m[None, None, :] * (-w22n) * mrr
            A = M + w22n * (wnc * wnr)
            W = (A * mm
                 + wnc * e[None, None, :]
                 + e[None, :, None] * wnr
                 + w22n * ee)
    return Theta


if __name__ == "__main__":
    B, K = 2, 2
    key = jax.random.PRNGKey(0)
    k1, k2 = jax.random.split(key)

    # Deterministic SPD batch of Theta matrices: A A^T / P + I
    A = jax.random.normal(k1, (B, P, P), dtype=jnp.float32)
    theta = jnp.einsum("bij,bkj->bik", A, A) / P + jnp.eye(P, dtype=jnp.float32)

    # Deterministic stand-ins for torch.randn(p-1) per (pass, column), embedded
    # into full-length vectors with a zero at the column's own position.
    vals = np.asarray(jax.random.normal(k2, (K, P, P - 1), dtype=jnp.float32))
    r_embedded_np = np.zeros((K, P, P), dtype=np.float32)
    idx = np.arange(P)
    for col in range(P):
        keep = np.concatenate([idx[:col], idx[col + 1:]])
        r_embedded_np[:, col, keep] = vals[:, col, :]
    r_embedded = jnp.asarray(r_embedded_np)

    out = spodnet_forward(theta, r_embedded, gy=1.0)
    out = jax.block_until_ready(out)

    ref = spodnet_reference(theta, r_embedded, gy=1.0)
    assert bool(jnp.all(jnp.isfinite(out)))
    np.testing.assert_allclose(np.asarray(out), np.asarray(ref), rtol=2e-3, atol=2e-3)
    print("KERNEL_OK")
</pallas_src>

<mosaic_0001>
module attributes {stable_mosaic.version = 11 : i64} {
  func.func @_spodnet_kernel(%arg0: i32, %arg1: memref<200xf32, #tpu.memory_space<smem>>, %arg2: memref<10x10x128xf32, #tpu.memory_space<vmem>>, %arg3: memref<10x128xf32, #tpu.memory_space<vmem>>, %arg4: memref<10x10x128xf32, #tpu.memory_space<vmem>>) attributes {dimension_semantics = [#tpu.dimension_semantics<parallel>], iteration_bounds = array<i64: 1>, scalar_prefetch = 0 : i64, scratch_operands = 1 : i64, tpu.core_type = #tpu.core_type<tc>, window_params = [{transform_indices = @transform_0, window_bounds = array<i64: 200>}, {transform_indices = @transform_1, window_bounds = array<i64: 10, 10, 128>}, {transform_indices = @transform_2, window_bounds = array<i64: 10, 128>}]} {
    %0 = tpu.iota {dimensions = array<i32: 0>} : vector<10x1xi32>
    %c0 = arith.constant 0 : index
    %c0_0 = arith.constant 0 : index
    %c0_1 = arith.constant 0 : index
    %1 = vector.load %arg2[%c0, %c0_0, %c0_1] : memref<10x10x128xf32, #tpu.memory_space<vmem>>, vector<10x10x128xf32>
    %c0_2 = arith.constant 0 : index
    %c0_3 = arith.constant 0 : index
    %c0_4 = arith.constant 0 : index
    %2 = vector.load %arg4[%c0_2, %c0_3, %c0_4] : memref<10x10x128xf32, #tpu.memory_space<vmem>>, vector<10x10x128xf32>
    tpu.vector_store %arg4[%c0_2, %c0_3, %c0_4], %1 {strides = array<i32>} : memref<10x10x128xf32, #tpu.memory_space<vmem>>, vector<10x10x128xf32>,
    %cst = arith.constant 0.000000e+00 : f32
    %3 = vector.broadcast %cst : f32 to vector<10x128xf32>
    %c0_5 = arith.constant 0 : index
    %c0_6 = arith.constant 0 : index
    %4 = vector.load %arg3[%c0_5, %c0_6] : memref<10x128xf32, #tpu.memory_space<vmem>>, vector<10x128xf32>
    tpu.vector_store %arg3[%c0_5, %c0_6], %3 {strides = array<i32>} : memref<10x128xf32, #tpu.memory_space<vmem>>, vector<10x128xf32>,
    %cst_7 = arith.constant 1.000000e+00 : f32
    %c0_i32 = arith.constant 0 : i32
    %c2_i32 = arith.constant 2 : i32
    %5 = arith.addi %c0_i32, %c2_i32 : i32
    %c1_i32 = arith.constant 1 : i32
    scf.for %arg5 = %c0_i32 to %5 step %c1_i32  : i32 {
      %c0_i32_9 = arith.constant 0 : i32
      %c10_i32 = arith.constant 10 : i32
      %6 = arith.addi %c0_i32_9, %c10_i32 : i32
      %c1_i32_10 = arith.constant 1 : i32
      scf.for %arg6 = %c0_i32_9 to %6 step %c1_i32_10  : i32 {
        %7 = vector.broadcast %arg6 : i32 to vector<10x1xi32>
        %8 = arith.cmpi eq, %0, %7 : vector<10x1xi32>
        %9 = arith.extui %8 : vector<10x1xi1> to vector<10x1xi32>
        %10 = arith.sitofp %9 : vector<10x1xi32> to vector<10x1xf32>
        %c10_i32_12 = arith.constant 10 : i32
        %11 = arith.muli %arg5, %c10_i32_12 : i32
        %12 = arith.addi %11, %arg6 : i32
        %c10_i32_13 = arith.constant 10 : i32
        %13 = arith.muli %12, %c10_i32_13 : i32
        %cst_14 = arith.constant 0.000000e+00 : f32
        %14 = vector.broadcast %cst_14 : f32 to vector<10x128xf32>
        %c0_15 = arith.constant 0 : index
        %c0_16 = arith.constant 0 : index
        %c0_17 = arith.constant 0 : index
        %15 = vector.load %arg4[%c0_15, %c0_16, %c0_17] : memref<10x10x128xf32, #tpu.memory_space<vmem>>, vector<1x10x128xf32>
        %16 = vector.shape_cast %15 : vector<1x10x128xf32> to vector<10x128xf32>
        %c0_i32_18 = arith.constant 0 : i32
        %17 = arith.addi %13, %c0_i32_18 : i32
        %18 = arith.index_cast %17 : i32 to index
        %19 = memref.load %arg1[%18] : memref<200xf32, #tpu.memory_space<smem>>
        %20 = vector.broadcast %19 : f32 to vector<10x128xf32>
        %21 = arith.mulf %16, %20 : vector<10x128xf32>
        %22 = arith.addf %14, %21 : vector<10x128xf32>
        %c1 = arith.constant 1 : index
        %c0_19 = arith.constant 0 : index
        %c0_20 = arith.constant 0 : index
        %23 = vector.load %arg4[%c1, %c0_19, %c0_20] : memref<10x10x128xf32, #tpu.memory_space<vmem>>, vector<1x10x128xf32>
        %24 = vector.shape_cast %23 : vector<1x10x128xf32> to vector<10x128xf32>
        %c1_i32_21 = arith.constant 1 : i32
        %25 = arith.addi %13, %c1_i32_21 : i32
        %26 = arith.index_cast %25 : i32 to index
        %27 = memref.load %arg1[%26] : memref<200xf32, #tpu.memory_space<smem>>
        %28 = vector.broadcast %27 : f32 to vector<10x128xf32>
        %29 = arith.mulf %24, %28 : vector<10x128xf32>
        %30 = arith.addf %22, %29 : vector<10x128xf32>
        %c2 = arith.constant 2 : index
        %c0_22 = arith.constant 0 : index
        %c0_23 = arith.constant 0 : index
        %31 = vector.load %arg4[%c2, %c0_22, %c0_23] : memref<10x10x128xf32, #tpu.memory_space<vmem>>, vector<1x10x128xf32>
        %32 = vector.shape_cast %31 : vector<1x10x128xf32> to vector<10x128xf32>
        %c2_i32_24 = arith.constant 2 : i32
        %33 = arith.addi %13, %c2_i32_24 : i32
        %34 = arith.index_cast %33 : i32 to index
        %35 = memref.load %arg1[%34] : memref<200xf32, #tpu.memory_space<smem>>
        %36 = vector.broadcast %35 : f32 to vector<10x128xf32>
        %37 = arith.mulf %32, %36 : vector<10x128xf32>
        %38 = arith.addf %30, %37 : vector<10x128xf32>
        %c3 = arith.constant 3 : index
        %c0_25 = arith.constant 0 : index
        %c0_26 = arith.constant 0 : index
        %39 = vector.load %arg4[%c3, %c0_25, %c0_26] : memref<10x10x128xf32, #tpu.memory_space<vmem>>, vector<1x10x128xf32>
        %40 = vector.shape_cast %39 : vector<1x10x128xf32> to vector<10x128xf32>
        %c3_i32 = arith.constant 3 : i32
        %41 = arith.addi %13, %c3_i32 : i32
        %42 = arith.index_cast %41 : i32 to index
        %43 = memref.load %arg1[%42] : memref<200xf32, #tpu.memory_space<smem>>
        %44 = vector.broadcast %43 : f32 to vector<10x128xf32>
        %45 = arith.mulf %40, %44 : vector<10x128xf32>
        %46 = arith.addf %38, %45 : vector<10x128xf32>
        %c4 = arith.constant 4 : index
        %c0_27 = arith.constant 0 : index
        %c0_28 = arith.constant 0 : index
        %47 = vector.load %arg4[%c4, %c0_27, %c0_28] : memref<10x10x128xf32, #tpu.memory_space<vmem>>, vector<1x10x128xf32>
        %48 = vector.shape_cast %47 : vector<1x10x128xf32> to vector<10x128xf32>
        %c4_i32 = arith.constant 4 : i32
        %49 = arith.addi %13, %c4_i32 : i32
        %50 = arith.index_cast %49 : i32 to index
        %51 = memref.load %arg1[%50] : memref<200xf32, #tpu.memory_space<smem>>
        %52 = vector.broadcast %51 : f32 to vector<10x128xf32>
        %53 = arith.mulf %48, %52 : vector<10x128xf32>
        %54 = arith.addf %46, %53 : vector<10x128xf32>
        %c5 = arith.constant 5 : index
        %c0_29 = arith.constant 0 : index
        %c0_30 = arith.constant 0 : index
        %55 = vector.load %arg4[%c5, %c0_29, %c0_30] : memref<10x10x128xf32, #tpu.memory_space<vmem>>, vector<1x10x128xf32>
        %56 = vector.shape_cast %55 : vector<1x10x128xf32> to vector<10x128xf32>
        %c5_i32 = arith.constant 5 : i32
        %57 = arith.addi %13, %c5_i32 : i32
        %58 = arith.index_cast %57 : i32 to index
        %59 = memref.load %arg1[%58] : memref<200xf32, #tpu.memory_space<smem>>
        %60 = vector.broadcast %59 : f32 to vector<10x128xf32>
        %61 = arith.mulf %56, %60 : vector<10x128xf32>
        %62 = arith.addf %54, %61 : vector<10x128xf32>
        %c6 = arith.constant 6 : index
        %c0_31 = arith.constant 0 : index
        %c0_32 = arith.constant 0 : index
        %63 = vector.load %arg4[%c6, %c0_31, %c0_32] : memref<10x10x128xf32, #tpu.memory_space<vmem>>, vector<1x10x128xf32>
        %64 = vector.shape_cast %63 : vector<1x10x128xf32> to vector<10x128xf32>
        %c6_i32 = arith.constant 6 : i32
        %65 = arith.addi %13, %c6_i32 : i32
        %66 = arith.index_cast %65 : i32 to index
        %67 = memref.load %arg1[%66] : memref<200xf32, #tpu.memory_space<smem>>
        %68 = vector.broadcast %67 : f32 to vector<10x128xf32>
        %69 = arith.mulf %64, %68 : vector<10x128xf32>
        %70 = arith.addf %62, %69 : vector<10x128xf32>
        %c7 = arith.constant 7 : index
        %c0_33 = arith.constant 0 : index
        %c0_34 = arith.constant 0 : index
        %71 = vector.load %arg4[%c7, %c0_33, %c0_34] : memref<10x10x128xf32, #tpu.memory_space<vmem>>, vector<1x10x128xf32>
        %72 = vector.shape_cast %71 : vector<1x10x128xf32> to vector<10x128xf32>
        %c7_i32 = arith.constant 7 : i32
        %73 = arith.addi %13, %c7_i32 : i32
        %74 = arith.index_cast %73 : i32 to index
        %75 = memref.load %arg1[%74] : memref<200xf32, #tpu.memory_space<smem>>
        %76 = vector.broadcast %75 : f32 to vector<10x128xf32>
        %77 = arith.mulf %72, %76 : vector<10x128xf32>
        %78 = arith.addf %70, %77 : vector<10x128xf32>
        %c8 = arith.constant 8 : index
        %c0_35 = arith.constant 0 : index
        %c0_36 = arith.constant 0 : index
        %79 = vector.load %arg4[%c8, %c0_35, %c0_36] : memref<10x10x128xf32, #tpu.memory_space<vmem>>, vector<1x10x128xf32>
        %80 = vector.shape_cast %79 : vector<1x10x128xf32> to vector<10x128xf32>
        %c8_i32 = arith.constant 8 : i32
        %81 = arith.addi %13, %c8_i32 : i32
        %82 = arith.index_cast %81 : i32 to index
        %83 = memref.load %arg1[%82] : memref<200xf32, #tpu.memory_space<smem>>
        %84 = vector.broadcast %83 : f32 to vector<10x128xf32>
        %85 = arith.mulf %80, %84 : vector<10x128xf32>
        %86 = arith.addf %78, %85 : vector<10x128xf32>
        %c9 = arith.constant 9 : index
        %c0_37 = arith.constant 0 : index
        %c0_38 = arith.constant 0 : index
        %87 = vector.load %arg4[%c9, %c0_37, %c0_38] : memref<10x10x128xf32, #tpu.memory_space<vmem>>, vector<1x10x128xf32>
        %88 = vector.shape_cast %87 : vector<1x10x128xf32> to vector<10x128xf32>
        %c9_i32 = arith.constant 9 : i32
        %89 = arith.addi %13, %c9_i32 : i32
        %90 = arith.index_cast %89 : i32 to index
        %91 = memref.load %arg1[%90] : memref<200xf32, #tpu.memory_space<smem>>
        %92 = vector.broadcast %91 : f32 to vector<10x128xf32>
        %93 = arith.mulf %88, %92 : vector<10x128xf32>
        %94 = arith.addf %86, %93 : vector<10x128xf32>
        %95 = arith.index_cast %arg6 : i32 to index
        %c0_39 = arith.constant 0 : index
        %c0_40 = arith.constant 0 : index
        %96 = vector.load %arg4[%95, %c0_39, %c0_40] : memref<10x10x128xf32, #tpu.memory_space<vmem>>, vector<1x10x128xf32>
        %97 = vector.shape_cast %96 : vector<1x10x128xf32> to vector<10x128xf32>
        %98 = vector.broadcast %10 : vector<10x1xf32> to vector<10x128xf32>
        %99 = arith.mulf %98, %97 : vector<10x128xf32>
        %cst_41 = arith.constant dense<0.000000e+00> : vector<128xf32>
        %100 = vector.multi_reduction <add>, %99, %cst_41 [0] : vector<10x128xf32> to vector<128xf32>
        %101 = vector.shape_cast %100 : vector<128xf32> to vector<1x128xf32>
        %cst_42 = arith.constant 1.000000e+00 : f32
        %102 = vector.broadcast %cst_42 : f32 to vector<1x128xf32>
        %103 = arith.divf %102, %101 : vector<1x128xf32>
        %104 = vector.broadcast %10 : vector<10x1xf32> to vector<10x128xf32>
        %105 = arith.mulf %104, %94 : vector<10x128xf32>
        %cst_43 = arith.constant dense<0.000000e+00> : vector<128xf32>
        %106 = vector.multi_reduction <add>, %105, %cst_43 [0] : vector<10x128xf32> to vector<128xf32>
        %107 = vector.shape_cast %106 : vector<128xf32> to vector<1x128xf32>
        %108 = vector.broadcast %103 : vector<1x128xf32> to vector<10x128xf32>
        %109 = arith.mulf %108, %97 : vector<10x128xf32>
        %110 = vector.broadcast %107 : vector<1x128xf32> to vector<10x128xf32>
        %111 = arith.mulf %110, %109 : vector<10x128xf32>
        %112 = arith.subf %94, %111 : vector<10x128xf32>
        %113 = arith.mulf %107, %107 : vector<1x128xf32>
        %114 = arith.mulf %113, %103 : vector<1x128xf32>
        %115 = vector.broadcast %cst_7 : f32 to vector<1x128xf32>
        %116 = arith.addf %115, %114 : vector<1x128xf32>
        %cst_44 = arith.constant 1.000000e+00 : f32
        %117 = vector.broadcast %cst_44 : f32 to vector<1x128xf32>
        %118 = arith.divf %117, %116 : vector<1x128xf32>
        %cst_45 = arith.constant 0.000000e+00 : f32
        %119 = vector.broadcast %cst_45 : f32 to vector<1x128xf32>
        %120 = arith.subf %119, %118 : vector<1x128xf32>
        %121 = vector.broadcast %120 : vector<1x128xf32> to vector<10x128xf32>
        %122 = arith.mulf %121, %112 : vector<10x128xf32>
        %123 = vector.broadcast %118 : vector<1x128xf32> to vector<10x128xf32>
        %124 = arith.mulf %123, %122 : vector<10x128xf32>
        %125 = vector.broadcast %10 : vector<10x1xf32> to vector<10x128xf32>
        %126 = arith.addf %124, %125 : vector<10x128xf32>
        %127 = vector.broadcast %10 : vector<10x1xf32> to vector<10x128xf32>
        %128 = vector.broadcast %118 : vector<1x128xf32> to vector<10x128xf32>
        %129 = arith.mulf %127, %128 : vector<10x128xf32>
        %130 = arith.addf %122, %129 : vector<10x128xf32>
        %131 = vector.extract_strided_slice %97 {offsets = [0, 0], sizes = [1, 128], strides = [1, 1]} : vector<10x128xf32> to vector<1x128xf32>
        %132 = vector.broadcast %131 : vector<1x128xf32> to vector<10x128xf32>
        %133 = arith.mulf %132, %109 : vector<10x128xf32>
        %134 = arith.subf %16, %133 : vector<10x128xf32>
        %135 = vector.extract_strided_slice %122 {offsets = [0, 0], sizes = [1, 128], strides = [1, 1]} : vector<10x128xf32> to vector<1x128xf32>
        %136 = vector.broadcast %135 : vector<1x128xf32> to vector<10x128xf32>
        %137 = arith.mulf %136, %126 : vector<10x128xf32>
        %138 = arith.addf %134, %137 : vector<10x128xf32>
        %c0_46 = arith.constant 0 : index
        %c0_47 = arith.constant 0 : index
        %c0_48 = arith.constant 0 : index
        %139 = vector.load %arg4[%c0_46, %c0_47, %c0_48] : memref<10x10x128xf32, #tpu.memory_space<vmem>>, vector<1x10x128xf32>
        %140 = vector.shape_cast %139 : vector<1x10x128xf32> to vector<10x128xf32>
        %141 = vector.shape_cast %138 : vector<10x128xf32> to vector<1x10x128xf32>
        tpu.vector_store %arg4[%c0_46, %c0_47, %c0_48], %141 {strides = array<i32>} : memref<10x10x128xf32, #tpu.memory_space<vmem>>, vector<1x10x128xf32>,
        %142 = vector.extract_strided_slice %97 {offsets = [1, 0], sizes = [1, 128], strides = [1, 1]} : vector<10x128xf32> to vector<1x128xf32>
        %143 = vector.broadcast %142 : vector<1x128xf32> to vector<10x128xf32>
        %144 = arith.mulf %143, %109 : vector<10x128xf32>
        %145 = arith.subf %24, %144 : vector<10x128xf32>
        %146 = vector.extract_strided_slice %122 {offsets = [1, 0], sizes = [1, 128], strides = [1, 1]} : vector<10x128xf32> to vector<1x128xf32>
        %147 = vector.broadcast %146 : vector<1x128xf32> to vector<10x128xf32>
        %148 = arith.mulf %147, %126 : vector<10x128xf32>
        %149 = arith.addf %145, %148 : vector<10x128xf32>
        %c1_49 = arith.constant 1 : index
        %c0_50 = arith.constant 0 : index
        %c0_51 = arith.constant 0 : index
        %150 = vector.load %arg4[%c1_49, %c0_50, %c0_51] : memref<10x10x128xf32, #tpu.memory_space<vmem>>, vector<1x10x128xf32>
        %151 = vector.shape_cast %150 : vector<1x10x128xf32> to vector<10x128xf32>
        %152 = vector.shape_cast %149 : vector<10x128xf32> to vector<1x10x128xf32>
        tpu.vector_store %arg4[%c1_49, %c0_50, %c0_51], %152 {strides = array<i32>} : memref<10x10x128xf32, #tpu.memory_space<vmem>>, vector<1x10x128xf32>,
        %153 = vector.extract_strided_slice %97 {offsets = [2, 0], sizes = [1, 128], strides = [1, 1]} : vector<10x128xf32> to vector<1x128xf32>
        %154 = vector.broadcast %153 : vector<1x128xf32> to vector<10x128xf32>
        %155 = arith.mulf %154, %109 : vector<10x128xf32>
        %156 = arith.subf %32, %155 : vector<10x128xf32>
        %157 = vector.extract_strided_slice %122 {offsets = [2, 0], sizes = [1, 128], strides = [1, 1]} : vector<10x128xf32> to vector<1x128xf32>
        %158 = vector.broadcast %157 : vector<1x128xf32> to vector<10x128xf32>
        %159 = arith.mulf %158, %126 : vector<10x128xf32>
        %160 = arith.addf %156, %159 : vector<10x128xf32>
        %c2_52 = arith.constant 2 : index
        %c0_53 = arith.constant 0 : index
        %c0_54 = arith.constant 0 : index
        %161 = vector.load %arg4[%c2_52, %c0_53, %c0_54] : memref<10x10x128xf32, #tpu.memory_space<vmem>>, vector<1x10x128xf32>
        %162 = vector.shape_cast %161 : vector<1x10x128xf32> to vector<10x128xf32>
        %163 = vector.shape_cast %160 : vector<10x128xf32> to vector<1x10x128xf32>
        tpu.vector_store %arg4[%c2_52, %c0_53, %c0_54], %163 {strides = array<i32>} : memref<10x10x128xf32, #tpu.memory_space<vmem>>, vector<1x10x128xf32>,
        %164 = vector.extract_strided_slice %97 {offsets = [3, 0], sizes = [1, 128], strides = [1, 1]} : vector<10x128xf32> to vector<1x128xf32>
        %165 = vector.broadcast %164 : vector<1x128xf32> to vector<10x128xf32>
        %166 = arith.mulf %165, %109 : vector<10x128xf32>
        %167 = arith.subf %40, %166 : vector<10x128xf32>
        %168 = vector.extract_strided_slice %122 {offsets = [3, 0], sizes = [1, 128], strides = [1, 1]} : vector<10x128xf32> to vector<1x128xf32>
        %169 = vector.broadcast %168 : vector<1x128xf32> to vector<10x128xf32>
        %170 = arith.mulf %169, %126 : vector<10x128xf32>
        %171 = arith.addf %167, %170 : vector<10x128xf32>
        %c3_55 = arith.constant 3 : index
        %c0_56 = arith.constant 0 : index
        %c0_57 = arith.constant 0 : index
        %172 = vector.load %arg4[%c3_55, %c0_56, %c0_57] : memref<10x10x128xf32, #tpu.memory_space<vmem>>, vector<1x10x128xf32>
        %173 = vector.shape_cast %172 : vector<1x10x128xf32> to vector<10x128xf32>
        %174 = vector.shape_cast %171 : vector<10x128xf32> to vector<1x10x128xf32>
        tpu.vector_store %arg4[%c3_55, %c0_56, %c0_57], %174 {strides = array<i32>} : memref<10x10x128xf32, #tpu.memory_space<vmem>>, vector<1x10x128xf32>,
        %175 = vector.extract_strided_slice %97 {offsets = [4, 0], sizes = [1, 128], strides = [1, 1]} : vector<10x128xf32> to vector<1x128xf32>
        %176 = vector.broadcast %175 : vector<1x128xf32> to vector<10x128xf32>
        %177 = arith.mulf %176, %109 : vector<10x128xf32>
        %178 = arith.subf %48, %177 : vector<10x128xf32>
        %179 = vector.extract_strided_slice %122 {offsets = [4, 0], sizes = [1, 128], strides = [1, 1]} : vector<10x128xf32> to vector<1x128xf32>
        %180 = vector.broadcast %179 : vector<1x128xf32> to vector<10x128xf32>
        %181 = arith.mulf %180, %126 : vector<10x128xf32>
        %182 = arith.addf %178, %181 : vector<10x128xf32>
        %c4_58 = arith.constant 4 : index
        %c0_59 = arith.constant 0 : index
        %c0_60 = arith.constant 0 : index
        %183 = vector.load %arg4[%c4_58, %c0_59, %c0_60] : memref<10x10x128xf32, #tpu.memory_space<vmem>>, vector<1x10x128xf32>
        %184 = vector.shape_cast %183 : vector<1x10x128xf32> to vector<10x128xf32>
        %185 = vector.shape_cast %182 : vector<10x128xf32> to vector<1x10x128xf32>
        tpu.vector_store %arg4[%c4_58, %c0_59, %c0_60], %185 {strides = array<i32>} : memref<10x10x128xf32, #tpu.memory_space<vmem>>, vector<1x10x128xf32>,
        %186 = vector.extract_strided_slice %97 {offsets = [5, 0], sizes = [1, 128], strides = [1, 1]} : vector<10x128xf32> to vector<1x128xf32>
        %187 = vector.broadcast %186 : vector<1x128xf32> to vector<10x128xf32>
        %188 = arith.mulf %187, %109 : vector<10x128xf32>
        %189 = arith.subf %56, %188 : vector<10x128xf32>
        %190 = vector.extract_strided_slice %122 {offsets = [5, 0], sizes = [1, 128], strides = [1, 1]} : vector<10x128xf32> to vector<1x128xf32>
        %191 = vector.broadcast %190 : vector<1x128xf32> to vector<10x128xf32>
        %192 = arith.mulf %191, %126 : vector<10x128xf32>
        %193 = arith.addf %189, %192 : vector<10x128xf32>
        %c5_61 = arith.constant 5 : index
        %c0_62 = arith.constant 0 : index
        %c0_63 = arith.constant 0 : index
        %194 = vector.load %arg4[%c5_61, %c0_62, %c0_63] : memref<10x10x128xf32, #tpu.memory_space<vmem>>, vector<1x10x128xf32>
        %195 = vector.shape_cast %194 : vector<1x10x128xf32> to vector<10x128xf32>
        %196 = vector.shape_cast %193 : vector<10x128xf32> to vector<1x10x128xf32>
        tpu.vector_store %arg4[%c5_61, %c0_62, %c0_63], %196 {strides = array<i32>} : memref<10x10x128xf32, #tpu.memory_space<vmem>>, vector<1x10x128xf32>,
        %197 = vector.extract_strided_slice %97 {offsets = [6, 0], sizes = [1, 128], strides = [1, 1]} : vector<10x128xf32> to vector<1x128xf32>
        %198 = vector.broadcast %197 : vector<1x128xf32> to vector<10x128xf32>
        %199 = arith.mulf %198, %109 : vector<10x128xf32>
        %200 = arith.subf %64, %199 : vector<10x128xf32>
        %201 = vector.extract_strided_slice %122 {offsets = [6, 0], sizes = [1, 128], strides = [1, 1]} : vector<10x128xf32> to vector<1x128xf32>
        %202 = vector.broadcast %201 : vector<1x128xf32> to vector<10x128xf32>
        %203 = arith.mulf %202, %126 : vector<10x128xf32>
        %204 = arith.addf %200, %203 : vector<10x128xf32>
        %c6_64 = arith.constant 6 : index
        %c0_65 = arith.constant 0 : index
        %c0_66 = arith.constant 0 : index
        %205 = vector.load %arg4[%c6_64, %c0_65, %c0_66] : memref<10x10x128xf32, #tpu.memory_space<vmem>>, vector<1x10x128xf32>
        %206 = vector.shape_cast %205 : vector<1x10x128xf32> to vector<10x128xf32>
        %207 = vector.shape_cast %204 : vector<10x128xf32> to vector<1x10x128xf32>
        tpu.vector_store %arg4[%c6_64, %c0_65, %c0_66], %207 {strides = array<i32>} : memref<10x10x128xf32, #tpu.memory_space<vmem>>, vector<1x10x128xf32>,
        %208 = vector.extract_strided_slice %97 {offsets = [7, 0], sizes = [1, 128], strides = [1, 1]} : vector<10x128xf32> to vector<1x128xf32>
        %209 = vector.broadcast %208 : vector<1x128xf32> to vector<10x128xf32>
        %210 = arith.mulf %209, %109 : vector<10x128xf32>
        %211 = arith.subf %72, %210 : vector<10x128xf32>
        %212 = vector.extract_strided_slice %122 {offsets = [7, 0], sizes = [1, 128], strides = [1, 1]} : vector<10x128xf32> to vector<1x128xf32>
        %213 = vector.broadcast %212 : vector<1x128xf32> to vector<10x128xf32>
        %214 = arith.mulf %213, %126 : vector<10x128xf32>
        %215 = arith.addf %211, %214 : vector<10x128xf32>
        %c7_67 = arith.constant 7 : index
        %c0_68 = arith.constant 0 : index
        %c0_69 = arith.constant 0 : index
        %216 = vector.load %arg4[%c7_67, %c0_68, %c0_69] : memref<10x10x128xf32, #tpu.memory_space<vmem>>, vector<1x10x128xf32>
        %217 = vector.shape_cast %216 : vector<1x10x128xf32> to vector<10x128xf32>
        %218 = vector.shape_cast %215 : vector<10x128xf32> to vector<1x10x128xf32>
        tpu.vector_store %arg4[%c7_67, %c0_68, %c0_69], %218 {strides = array<i32>} : memref<10x10x128xf32, #tpu.memory_space<vmem>>, vector<1x10x128xf32>,
        %219 = vector.extract_strided_slice %97 {offsets = [8, 0], sizes = [1, 128], strides = [1, 1]} : vector<10x128xf32> to vector<1x128xf32>
        %220 = vector.broadcast %219 : vector<1x128xf32> to vector<10x128xf32>
        %221 = arith.mulf %220, %109 : vector<10x128xf32>
        %222 = arith.subf %80, %221 : vector<10x128xf32>
        %223 = vector.extract_strided_slice %122 {offsets = [8, 0], sizes = [1, 128], strides = [1, 1]} : vector<10x128xf32> to vector<1x128xf32>
        %224 = vector.broadcast %223 : vector<1x128xf32> to vector<10x128xf32>
        %225 = arith.mulf %224, %126 : vector<10x128xf32>
        %226 = arith.addf %222, %225 : vector<10x128xf32>
        %c8_70 = arith.constant 8 : index
        %c0_71 = arith.constant 0 : index
        %c0_72 = arith.constant 0 : index
        %227 = vector.load %arg4[%c8_70, %c0_71, %c0_72] : memref<10x10x128xf32, #tpu.memory_space<vmem>>, vector<1x10x128xf32>
        %228 = vector.shape_cast %227 : vector<1x10x128xf32> to vector<10x128xf32>
        %229 = vector.shape_cast %226 : vector<10x128xf32> to vector<1x10x128xf32>
        tpu.vector_store %arg4[%c8_70, %c0_71, %c0_72], %229 {strides = array<i32>} : memref<10x10x128xf32, #tpu.memory_space<vmem>>, vector<1x10x128xf32>,
        %230 = vector.extract_strided_slice %97 {offsets = [9, 0], sizes = [1, 128], strides = [1, 1]} : vector<10x128xf32> to vector<1x128xf32>
        %231 = vector.broadcast %230 : vector<1x128xf32> to vector<10x128xf32>
        %232 = arith.mulf %231, %109 : vector<10x128xf32>
        %233 = arith.subf %88, %232 : vector<10x128xf32>
        %234 = vector.extract_strided_slice %122 {offsets = [9, 0], sizes = [1, 128], strides = [1, 1]} : vector<10x128xf32> to vector<1x128xf32>
        %235 = vector.broadcast %234 : vector<1x128xf32> to vector<10x128xf32>
        %236 = arith.mulf %235, %126 : vector<10x128xf32>
        %237 = arith.addf %233, %236 : vector<10x128xf32>
        %c9_73 = arith.constant 9 : index
        %c0_74 = arith.constant 0 : index
        %c0_75 = arith.constant 0 : index
        %238 = vector.load %arg4[%c9_73, %c0_74, %c0_75] : memref<10x10x128xf32, #tpu.memory_space<vmem>>, vector<1x10x128xf32>
        %239 = vector.shape_cast %238 : vector<1x10x128xf32> to vector<10x128xf32>
        %240 = vector.shape_cast %237 : vector<10x128xf32> to vector<1x10x128xf32>
        tpu.vector_store %arg4[%c9_73, %c0_74, %c0_75], %240 {strides = array<i32>} : memref<10x10x128xf32, #tpu.memory_space<vmem>>, vector<1x10x128xf32>,
        %241 = arith.index_cast %arg6 : i32 to index
        %c0_76 = arith.constant 0 : index
        %c0_77 = arith.constant 0 : index
        %242 = vector.load %arg4[%241, %c0_76, %c0_77] : memref<10x10x128xf32, #tpu.memory_space<vmem>>, vector<1x10x128xf32>
        %243 = vector.shape_cast %242 : vector<1x10x128xf32> to vector<10x128xf32>
        %244 = vector.shape_cast %130 : vector<10x128xf32> to vector<1x10x128xf32>
        tpu.vector_store %arg4[%241, %c0_76, %c0_77], %244 {strides = array<i32>} : memref<10x10x128xf32, #tpu.memory_space<vmem>>, vector<1x10x128xf32>,
        %c1_i32_78 = arith.constant 1 : i32
        %245 = arith.cmpi eq, %arg5, %c1_i32_78 : i32
        %246 = arith.extui %245 : i1 to i32
        %c0_i32_79 = arith.constant 0 : i32
        %247 = arith.cmpi ne, %246, %c0_i32_79 : i32
        scf.if %247 {
          %cst_80 = arith.constant 0.000000e+00 : f32
          %248 = vector.broadcast %cst_80 : f32 to vector<1x128xf32>
          %c0_i32_81 = arith.constant 0 : i32
          %249 = arith.addi %13, %c0_i32_81 : i32
          %250 = arith.index_cast %249 : i32 to index
          %251 = memref.load %arg1[%250] : memref<200xf32, #tpu.memory_space<smem>>
          %252 = vector.extract_strided_slice %94 {offsets = [0, 0], sizes = [1, 128], strides = [1, 1]} : vector<10x128xf32> to vector<1x128xf32>
          %253 = vector.broadcast %251 : f32 to vector<1x128xf32>
          %254 = arith.mulf %253, %252 : vector<1x128xf32>
          %255 = arith.addf %248, %254 : vector<1x128xf32>
          %c1_i32_82 = arith.constant 1 : i32
          %256 = arith.addi %13, %c1_i32_82 : i32
          %257 = arith.index_cast %256 : i32 to index
          %258 = memref.load %arg1[%257] : memref<200xf32, #tpu.memory_space<smem>>
          %259 = vector.extract_strided_slice %94 {offsets = [1, 0], sizes = [1, 128], strides = [1, 1]} : vector<10x128xf32> to vector<1x128xf32>
          %260 = vector.broadcast %258 : f32 to vector<1x128xf32>
          %261 = arith.mulf %260, %259 : vector<1x128xf32>
          %262 = arith.addf %255, %261 : vector<1x128xf32>
          %c2_i32_83 = arith.constant 2 : i32
          %263 = arith.addi %13, %c2_i32_83 : i32
          %264 = arith.index_cast %263 : i32 to index
          %265 = memref.load %arg1[%264] : memref<200xf32, #tpu.memory_space<smem>>
          %266 = vector.extract_strided_slice %94 {offsets = [2, 0], sizes = [1, 128], strides = [1, 1]} : vector<10x128xf32> to vector<1x128xf32>
          %267 = vector.broadcast %265 : f32 to vector<1x128xf32>
          %268 = arith.mulf %267, %266 : vector<1x128xf32>
          %269 = arith.addf %262, %268 : vector<1x128xf32>
          %c3_i32_84 = arith.constant 3 : i32
          %270 = arith.addi %13, %c3_i32_84 : i32
          %271 = arith.index_cast %270 : i32 to index
          %272 = memref.load %arg1[%271] : memref<200xf32, #tpu.memory_space<smem>>
          %273 = vector.extract_strided_slice %94 {offsets = [3, 0], sizes = [1, 128], strides = [1, 1]} : vector<10x128xf32> to vector<1x128xf32>
          %274 = vector.broadcast %272 : f32 to vector<1x128xf32>
          %275 = arith.mulf %274, %273 : vector<1x128xf32>
          %276 = arith.addf %269, %275 : vector<1x128xf32>
          %c4_i32_85 = arith.constant 4 : i32
          %277 = arith.addi %13, %c4_i32_85 : i32
          %278 = arith.index_cast %277 : i32 to index
          %279 = memref.load %arg1[%278] : memref<200xf32, #tpu.memory_space<smem>>
          %280 = vector.extract_strided_slice %94 {offsets = [4, 0], sizes = [1, 128], strides = [1, 1]} : vector<10x128xf32> to vector<1x128xf32>
          %281 = vector.broadcast %279 : f32 to vector<1x128xf32>
          %282 = arith.mulf %281, %280 : vector<1x128xf32>
          %283 = arith.addf %276, %282 : vector<1x128xf32>
          %c5_i32_86 = arith.constant 5 : i32
          %284 = arith.addi %13, %c5_i32_86 : i32
          %285 = arith.index_cast %284 : i32 to index
          %286 = memref.load %arg1[%285] : memref<200xf32, #tpu.memory_space<smem>>
          %287 = vector.extract_strided_slice %94 {offsets = [5, 0], sizes = [1, 128], strides = [1, 1]} : vector<10x128xf32> to vector<1x128xf32>
          %288 = vector.broadcast %286 : f32 to vector<1x128xf32>
          %289 = arith.mulf %288, %287 : vector<1x128xf32>
          %290 = arith.addf %283, %289 : vector<1x128xf32>
          %c6_i32_87 = arith.constant 6 : i32
          %291 = arith.addi %13, %c6_i32_87 : i32
          %292 = arith.index_cast %291 : i32 to index
          %293 = memref.load %arg1[%292] : memref<200xf32, #tpu.memory_space<smem>>
          %294 = vector.extract_strided_slice %94 {offsets = [6, 0], sizes = [1, 128], strides = [1, 1]} : vector<10x128xf32> to vector<1x128xf32>
          %295 = vector.broadcast %293 : f32 to vector<1x128xf32>
          %296 = arith.mulf %295, %294 : vector<1x128xf32>
          %297 = arith.addf %290, %296 : vector<1x128xf32>
          %c7_i32_88 = arith.constant 7 : i32
          %298 = arith.addi %13, %c7_i32_88 : i32
          %299 = arith.index_cast %298 : i32 to index
          %300 = memref.load %arg1[%299] : memref<200xf32, #tpu.memory_space<smem>>
          %301 = vector.extract_strided_slice %94 {offsets = [7, 0], sizes = [1, 128], strides = [1, 1]} : vector<10x128xf32> to vector<1x128xf32>
          %302 = vector.broadcast %300 : f32 to vector<1x128xf32>
          %303 = arith.mulf %302, %301 : vector<1x128xf32>
          %304 = arith.addf %297, %303 : vector<1x128xf32>
          %c8_i32_89 = arith.constant 8 : i32
          %305 = arith.addi %13, %c8_i32_89 : i32
          %306 = arith.index_cast %305 : i32 to index
          %307 = memref.load %arg1[%306] : memref<200xf32, #tpu.memory_space<smem>>
          %308 = vector.extract_strided_slice %94 {offsets = [8, 0], sizes = [1, 128], strides = [1, 1]} : vector<10x128xf32> to vector<1x128xf32>
          %309 = vector.broadcast %307 : f32 to vector<1x128xf32>
          %310 = arith.mulf %309, %308 : vector<1x128xf32>
          %311 = arith.addf %304, %310 : vector<1x128xf32>
          %c9_i32_90 = arith.constant 9 : i32
          %312 = arith.addi %13, %c9_i32_90 : i32
          %313 = arith.index_cast %312 : i32 to index
          %314 = memref.load %arg1[%313] : memref<200xf32, #tpu.memory_space<smem>>
          %315 = vector.extract_strided_slice %94 {offsets = [9, 0], sizes = [1, 128], strides = [1, 1]} : vector<10x128xf32> to vector<1x128xf32>
          %316 = vector.broadcast %314 : f32 to vector<1x128xf32>
          %317 = arith.mulf %316, %315 : vector<1x128xf32>
          %318 = arith.addf %311, %317 : vector<1x128xf32>
          %319 = vector.broadcast %cst_7 : f32 to vector<1x128xf32>
          %320 = arith.addf %319, %318 : vector<1x128xf32>
          %c0_91 = arith.constant 0 : index
          %c0_92 = arith.constant 0 : index
          %321 = vector.load %arg3[%c0_91, %c0_92] : memref<10x128xf32, #tpu.memory_space<vmem>>, vector<10x128xf32>
          %322 = vector.broadcast %10 : vector<10x1xf32> to vector<10x128xf32>
          %323 = vector.broadcast %320 : vector<1x128xf32> to vector<10x128xf32>
          %324 = arith.mulf %322, %323 : vector<10x128xf32>
          %325 = arith.addf %321, %324 : vector<10x128xf32>
          %c0_93 = arith.constant 0 : index
          %c0_94 = arith.constant 0 : index
          %326 = vector.load %arg3[%c0_93, %c0_94] : memref<10x128xf32, #tpu.memory_space<vmem>>, vector<10x128xf32>
          tpu.vector_store %arg3[%c0_93, %c0_94], %325 {strides = array<i32>} : memref<10x128xf32, #tpu.memory_space<vmem>>, vector<10x128xf32>,
        } else {
        }
      }
      %c10_i32_11 = arith.constant 10 : i32
    }
    %c2_i32_8 = arith.constant 2 : i32
    return
  }
  func.func @transform_0(%arg0: i32) -> i32 {
    %c0_i32 = arith.constant 0 : i32
    %c0_i32_0 = arith.constant 0 : i32
    return %c0_i32 : i32
  }
  func.func @transform_1(%arg0: i32) -> (i32, i32, i32) {
    %c0_i32 = arith.constant 0 : i32
    %c0_i32_0 = arith.constant 0 : i32
    %c0_i32_1 = arith.constant 0 : i32
    return %c0_i32, %c0_i32_0, %arg0 : i32, i32, i32
  }
  func.func @transform_2(%arg0: i32) -> (i32, i32) {
    %c0_i32 = arith.constant 0 : i32
    %c0_i32_0 = arith.constant 0 : i32
    return %c0_i32, %arg0 : i32, i32
  }
}

</mosaic_0001>

<llo_original>
// kernel: tpu_custom_call.1
$region0: #{tpu_custom_call.1}
  #allocation0 [shape = 'u32[]', space=smem, size = 0x4, offset = 0x4, fixed_abs, tag = 'smem constant byte address 0x4 - core index']
  #allocation1 [shape = 'u32[144,128]{1,0:T(1,128)}', space=vmem, size = 0x12000, scoped, tag = 'internal scratch']
  #allocation2 [shape = 'f32[10,10,128]{2,1,0:T(8,128)}', space=vmem, size = 0x14000, scoped, tag = 'scratch operand']
  %s0 = inlined_call_operand.hbm [shape: f32[200], index: 0, kind: input, shape index: {}]
  %s1 = inlined_call_operand.hbm [shape: f32[10,10,128], index: 1, kind: input, shape index: {}]
  %s2 = inlined_call_operand.hbm [shape: f32[10,128], index: 2, kind: output, shape index: {}]
  %s3 = sld [smem:[#allocation0]]
  $region44: #{tpu_custom_call.1} parent=0
    _
  %s5 = ssub.s32 1, %s3
  %s6 = scalar_select 0, %s5, %s3
  $region1: #{tpu_custom_call.1} parent=0
    #allocation3 [shape = 'u8[1024]{0}', space=smem, size = 0x400, scoped, tag = 'input window, operand 0, single buffered']
    #allocation4 [shape = 's32[1]{0}', space=sflag, size = 0x4, scoped, tag = 'scoped memory for tpu_custom_call.1']
    #allocation5 [shape = 's32[1]{0}', space=sflag, size = 0x4, scoped, tag = 'scoped memory for tpu_custom_call.1']
    #allocation6 [shape = 's32[1]{0}', space=sflag, size = 0x4, scoped, tag = 'scoped memory for tpu_custom_call.1']
    #allocation7 [shape = 'u8[81920]{0}', space=vmem, size = 0x14000, scoped, tag = 'input window, operand 1, single buffered']
    #allocation8 [shape = 'u8[8192]{0}', space=vmem, size = 0x2000, scoped, tag = 'output window, operand 0, single buffered']
    %7 = vsyncpa [#allocation6], 0
    %8 = vsyncpa [#allocation4], 0
    %9 = vsyncpa [#allocation5], 0
    // Predicated region
    $region2: #{tpu_custom_call.1} parent=1 // pred_check
      _
    $region3: #{tpu_custom_call.1} parent=1 // pred_check_branch
      %11 = sbr.rel (0) target = $region5
    $region4: #{tpu_custom_call.1} parent=1 // pred_region
      %s13 = ssub.s32 32, 32
      %14 = vsyncadd [#allocation6], %s13
      %17 = dma.hbm_to_smem %s0, 32, [#allocation3], [#allocation6]
    $region5: #{tpu_custom_call.1} parent=1 // pred_fallthru
      _
    // Predicated region
    $region6: #{tpu_custom_call.1} parent=1 // pred_check
      _
    $region7: #{tpu_custom_call.1} parent=1 // pred_check_branch
      %19 = sbr.rel (0) target = $region9
    $region8: #{tpu_custom_call.1} parent=1 // pred_region
      %s21 = ssub.s32 2560, 2560
      %22 = vsyncadd [#allocation4], %s21
      %s23 = sshll.u32 [#allocation7], 4
      %s24 = int_to_ptr.vmem [resolvable:$true] %s23
      %29 = dma.hbm_to_vmem [thread:$0]  %s1, 2560, %s24, [#allocation4], 128, 128, 8
    $region9: #{tpu_custom_call.1} parent=1 // pred_fallthru
      _
    // Predicated region
    $region10: #{tpu_custom_call.1} parent=1 // pred_check
      _
    $region11: #{tpu_custom_call.1} parent=1 // pred_check_branch
      %31 = sbr.rel (0) target = $region13
    $region12: #{tpu_custom_call.1} parent=1 // pred_region
      %32 = dma.done [#allocation6], 32
    $region13: #{tpu_custom_call.1} parent=1 // pred_fallthru
      _
    // Predicated region
    $region14: #{tpu_custom_call.1} parent=1 // pred_check
      _
    $region15: #{tpu_custom_call.1} parent=1 // pred_check_branch
      %34 = sbr.rel (0) target = $region17
    $region16: #{tpu_custom_call.1} parent=1 // pred_region
      %35 = dma.done [#allocation4], 2560
    $region17: #{tpu_custom_call.1} parent=1 // pred_fallthru
      _
    %36 = sfence
    %v37 = vlaneseq
    %v38 = vshrl.u32 %v37, 7
    %v39 = vadd.s32 %v38, 8
    %v40 = vld [vmem:[#allocation7] sm:$0xff]
    %v41 = vld [vmem:[#allocation7 + $0x8] sm:$0x3]
    %v42 = vld [vmem:[#allocation7 + $0x10] sm:$0xff]
    %v43 = vld [vmem:[#allocation7 + $0x18] sm:$0x3]
    %v44 = vld [vmem:[#allocation7 + $0x20] sm:$0xff]
    %v45 = vld [vmem:[#allocation7 + $0x28] sm:$0x3]
    %v46 = vld [vmem:[#allocation7 + $0x30] sm:$0xff]
    %v47 = vld [vmem:[#allocation7 + $0x38] sm:$0x3]
    %v48 = vld [vmem:[#allocation7 + $0x40] sm:$0xff]
    %v49 = vld [vmem:[#allocation7 + $0x48] sm:$0x3]
    %v50 = vld [vmem:[#allocation7 + $0x50] sm:$0xff]
    %v51 = vld [vmem:[#allocation7 + $0x58] sm:$0x3]
    %v52 = vld [vmem:[#allocation7 + $0x60] sm:$0xff]
    %v53 = vld [vmem:[#allocation7 + $0x68] sm:$0x3]
    %v54 = vld [vmem:[#allocation7 + $0x70] sm:$0xff]
    %v55 = vld [vmem:[#allocation7 + $0x78] sm:$0x3]
    %v56 = vld [vmem:[#allocation7 + $0x80] sm:$0xff]
    %v57 = vld [vmem:[#allocation7 + $0x88] sm:$0x3]
    %v58 = vld [vmem:[#allocation7 + $0x90] sm:$0xff]
    %v59 = vld [vmem:[#allocation7 + $0x98] sm:$0x3]
    %60 = vst [vmem:[#allocation2] sm:$0xff] %v40
    %61 = vst [vmem:[#allocation2 + $0x8] sm:$0x3] %v41
    %62 = vst [vmem:[#allocation2 + $0x10] sm:$0xff] %v42
    %63 = vst [vmem:[#allocation2 + $0x18] sm:$0x3] %v43
    %64 = vst [vmem:[#allocation2 + $0x20] sm:$0xff] %v44
    %65 = vst [vmem:[#allocation2 + $0x28] sm:$0x3] %v45
    %66 = vst [vmem:[#allocation2 + $0x30] sm:$0xff] %v46
    %67 = vst [vmem:[#allocation2 + $0x38] sm:$0x3] %v47
    %68 = vst [vmem:[#allocation2 + $0x40] sm:$0xff] %v48
    %69 = vst [vmem:[#allocation2 + $0x48] sm:$0x3] %v49
    %70 = vst [vmem:[#allocation2 + $0x50] sm:$0xff] %v50
    %71 = vst [vmem:[#allocation2 + $0x58] sm:$0x3] %v51
    %72 = vst [vmem:[#allocation2 + $0x60] sm:$0xff] %v52
    %73 = vst [vmem:[#allocation2 + $0x68] sm:$0x3] %v53
    %74 = vst [vmem:[#allocation2 + $0x70] sm:$0xff] %v54
    %75 = vst [vmem:[#allocation2 + $0x78] sm:$0x3] %v55
    %76 = vst [vmem:[#allocation2 + $0x80] sm:$0xff] %v56
    %77 = vst [vmem:[#allocation2 + $0x88] sm:$0x3] %v57
    %78 = vst [vmem:[#allocation2 + $0x90] sm:$0xff] %v58
    %79 = vst [vmem:[#allocation2 + $0x98] sm:$0x3] %v59
    %80 = vst [vmem:[#allocation8] sm:$0xff] 0.0
    %81 = vst [vmem:[#allocation8 + $0x8] sm:$0x3] 0.0
    loop: start=0, step=1, limit=2
    $region18: #{tpu_custom_call.1} parent=1 // loop_pre_header
      _
    $region19: #{tpu_custom_call.1} parent=1 // loop_header
      %s83 = sphi 0, %s87
      %p84 = scmp.ge.s32.totalorder %s83, 2
    $region20: #{tpu_custom_call.1} parent=1 // loop_header_branch
      %86 = sbr.rel (%p84) target = $region24
    $region21: #{tpu_custom_call.1} parent=1 // loop_body
      loop: start=0, step=1, limit=10
      $region25: #{tpu_custom_call.1} parent=21 // loop_pre_header
        _
      $region26: #{tpu_custom_call.1} parent=21 // loop_header
        %s89 = sphi 0, %s93
        %p90 = scmp.ge.s32.totalorder %s89, 10
      $region27: #{tpu_custom_call.1} parent=21 // loop_header_branch
        %92 = sbr.rel (%p90) target = $region31
      $region28: #{tpu_custom_call.1} parent=21 // loop_body
        %v94 = vstv %s89
        %vm95 = vcmp.eq.s32.totalorder %v38, %v94
        %vm96 = vcmp.eq.s32.totalorder %v39, %v94
        %v97 = vsel %vm95, 1, 0
        %v98 = vsel %vm96, 1, 0
        %v99 = vcvt.s32.f32 %v97
        %v100 = vcvt.s32.f32 %v98
        %s101 = smul.u32 %s83, 10
        %s102 = sadd.s32 %s101, %s89
        %s103 = smul.u32 %s102, 10
        %v104 = vld [vmem:[#allocation2] sm:$0xff]
        %v105 = vld [vmem:[#allocation2 + $0x8] sm:$0x3]
        %s106 = sld [smem:[#allocation3 + %s103]]
        %v107 = vstv %s106
        %v108 = vmul.f32 %v104, %v107
        %v109 = vmul.f32 %v105, %v107
        %v110 = vadd.f32 %v108, 0.0
        %v111 = vadd.f32 %v109, 0.0
        %s112 = scalar_lea.vmem [#allocation2], 16
        %v113 = vld [vmem:[%s112] sm:$0xff]
        %v114 = vld [vmem:[%s112 + $0x8] sm:$0x3]
        %s115 = sadd.s32 %s103, 1
        %s116 = sld [smem:[#allocation3 + %s115]]
        %v117 = vstv %s116
        %v118 = vmul.f32 %v113, %v117
        %v119 = vmul.f32 %v114, %v117
        %v120 = vadd.f32 %v110, %v118
        %v121 = vadd.f32 %v111, %v119
        %s122 = scalar_lea.vmem [#allocation2], 32
        %v123 = vld [vmem:[%s122] sm:$0xff]
        %v124 = vld [vmem:[%s122 + $0x8] sm:$0x3]
        %s125 = sadd.s32 %s103, 2
        %s126 = sld [smem:[#allocation3 + %s125]]
        %v127 = vstv %s126
        %v128 = vmul.f32 %v123, %v127
        %v129 = vmul.f32 %v124, %v127
        %v130 = vadd.f32 %v120, %v128
        %v131 = vadd.f32 %v121, %v129
        %s132 = scalar_lea.vmem [#allocation2], 48
        %v133 = vld [vmem:[%s132] sm:$0xff]
        %v134 = vld [vmem:[%s132 + $0x8] sm:$0x3]
        %s135 = sadd.s32 %s103, 3
        %s136 = sld [smem:[#allocation3 + %s135]]
        %v137 = vstv %s136
        %v138 = vmul.f32 %v133, %v137
        %v139 = vmul.f32 %v134, %v137
        %v140 = vadd.f32 %v130, %v138
        %v141 = vadd.f32 %v131, %v139
        %s142 = scalar_lea.vmem [#allocation2], 64
        %v143 = vld [vmem:[%s142] sm:$0xff]
        %v144 = vld [vmem:[%s142 + $0x8] sm:$0x3]
        %s145 = sadd.s32 %s103, 4
        %s146 = sld [smem:[#allocation3 + %s145]]
        %v147 = vstv %s146
        %v148 = vmul.f32 %v143, %v147
        %v149 = vmul.f32 %v144, %v147
        %v150 = vadd.f32 %v140, %v148
        %v151 = vadd.f32 %v141, %v149
        %s152 = scalar_lea.vmem [#allocation2], 80
        %v153 = vld [vmem:[%s152] sm:$0xff]
        %v154 = vld [vmem:[%s152 + $0x8] sm:$0x3]
        %s155 = sadd.s32 %s103, 5
        %s156 = sld [smem:[#allocation3 + %s155]]
        %v157 = vstv %s156
        %v158 = vmul.f32 %v153, %v157
        %v159 = vmul.f32 %v154, %v157
        %v160 = vadd.f32 %v150, %v158
        %v161 = vadd.f32 %v151, %v159
        %s162 = scalar_lea.vmem [#allocation2], 96
        %v163 = vld [vmem:[%s162] sm:$0xff]
        %v164 = vld [vmem:[%s162 + $0x8] sm:$0x3]
        %s165 = sadd.s32 %s103, 6
        %s166 = sld [smem:[#allocation3 + %s165]]
        %v167 = vstv %s166
        %v168 = vmul.f32 %v163, %v167
        %v169 = vmul.f32 %v164, %v167
        %v170 = vadd.f32 %v160, %v168
        %v171 = vadd.f32 %v161, %v169
        %s172 = scalar_lea.vmem [#allocation2], 112
        %v173 = vld [vmem:[%s172] sm:$0xff]
        %v174 = vld [vmem:[%s172 + $0x8] sm:$0x3]
        %s175 = sadd.s32 %s103, 7
        %s176 = sld [smem:[#allocation3 + %s175]]
        %v177 = vstv %s176
        %v178 = vmul.f32 %v173, %v177
        %v179 = vmul.f32 %v174, %v177
        %v180 = vadd.f32 %v170, %v178
        %v181 = vadd.f32 %v171, %v179
        %s182 = scalar_lea.vmem [#allocation2], 128
        %v183 = vld [vmem:[%s182] sm:$0xff]
        %v184 = vld [vmem:[%s182 + $0x8] sm:$0x3]
        %s185 = sadd.s32 %s103, 8
        %s186 = sld [smem:[#allocation3 + %s185]]
        %v187 = vstv %s186
        %v188 = vmul.f32 %v183, %v187
        %v189 = vmul.f32 %v184, %v187
        %v190 = vadd.f32 %v180, %v188
        %v191 = vadd.f32 %v181, %v189
        %s192 = scalar_lea.vmem [#allocation2], 144
        %v193 = vld [vmem:[%s192] sm:$0xff]
        %v194 = vld [vmem:[%s192 + $0x8] sm:$0x3]
        %s195 = sadd.s32 %s103, 9
        %s196 = sld [smem:[#allocation3 + %s195]]
        %v197 = vstv %s196
        %v198 = vmul.f32 %v193, %v197
        %v199 = vmul.f32 %v194, %v197
        %v200 = vadd.f32 %v190, %v198
        %v201 = vadd.f32 %v191, %v199
        %s202 = smul.u32 %s89, 16
        %s203 = scalar_lea.vmem [#allocation2], %s202
        %v204 = vld [vmem:[%s203] sm:$0xff]
        %v205 = vld [vmem:[%s203 + $0x8] sm:$0x3]
        %v206 = vmul.f32 %v99, %v204
        %v207 = vmul.f32 %v100, %v205
        %vm208 = vcmask 1041408
        %v209 = vsel %vm208, %v207, 0.0
        %v210 = vadd.f32 %v206, %v209
        %v211 = vrot.slane %v210, 4
        %v212 = vadd.f32 %v210, %v211
        %v213 = vrot.slane %v212, 2
        %v214 = vadd.f32 %v212, %v213
        %v215 = vrot.slane %v214, 1
        %v216 = vadd.f32 %v214, %v215
        %v217 = vrcp.pop %v216
        %v218 = vmul.f32 1.0, %v217
        %v219 = vmul.f32 %v99, %v200
        %v220 = vmul.f32 %v100, %v201
        %v221 = vsel %vm208, %v220, 0.0
        %v222 = vadd.f32 %v219, %v221
        %v223 = vrot.slane %v222, 4
        %v224 = vadd.f32 %v222, %v223
        %v225 = vrot.slane %v224, 2
        %v226 = vadd.f32 %v224, %v225
        %v227 = vrot.slane %v226, 1
        %v228 = vadd.f32 %v226, %v227
        %v229 = vmul.f32 %v218, %v204
        %v230 = vmul.f32 %v218, %v205
        %v231 = vmul.f32 %v228, %v229
        %v232 = vmul.f32 %v228, %v230
        %v233 = vsub.f32 %v200, %v231
        %v234 = vsub.f32 %v201, %v232
        %v235 = vmul.f32 %v228, %v228
        %v236 = vmul.f32 %v235, %v218
        %v237 = vadd.f32 %v236, 1.0
        %v238 = vrcp.pop %v237
        %v239 = vmul.f32 1.0, %v238
        %v240 = vsub.f32 0.0, %v239
        %v241 = vmul.f32 %v240, %v233
        %v242 = vmul.f32 %v240, %v234
        %v243 = vmul.f32 %v239, %v241
        %v244 = vmul.f32 %v239, %v242
        %v245 = vadd.f32 %v243, %v99
        %v246 = vadd.f32 %v244, %v100
        %v247 = vmul.f32 %v99, %v239
        %v248 = vmul.f32 %v100, %v239
        %v249 = vadd.f32 %v241, %v247
        %v250 = vadd.f32 %v242, %v248
        %v251 = vlaneseq
        %v252 = vshrl.u32 %v251, 7
        %v253 = vsub.s32 0, %v252
        %v254 = vrot.slane %v204, %v253
        %v255 = vmul.f32 %v254, %v229
        %v256 = vmul.f32 %v254, %v230
        %v257 = vsub.f32 %v104, %v255
        %v258 = vsub.f32 %v105, %v256
        %v259 = vlaneseq
        %v260 = vshrl.u32 %v259, 7
        %v261 = vsub.s32 0, %v260
        %v262 = vrot.slane %v241, %v261
        %v263 = vmul.f32 %v262, %v245
        %v264 = vmul.f32 %v262, %v246
        %v265 = vadd.f32 %v257, %v263
        %v266 = vadd.f32 %v258, %v264
        %267 = vst [vmem:[#allocation2] sm:$0xff] %v265
        %268 = vst [vmem:[#allocation2 + $0x8] sm:$0x3] %v266
        %v269 = vlaneseq
        %v270 = vshrl.u32 %v269, 7
        %v271 = vsub.s32 1, %v270
        %v272 = vrot.slane %v204, %v271
        %v273 = vmul.f32 %v272, %v229
        %v274 = vmul.f32 %v272, %v230
        %v275 = vsub.f32 %v113, %v273
        %v276 = vsub.f32 %v114, %v274
        %v277 = vlaneseq
        %v278 = vshrl.u32 %v277, 7
        %v279 = vsub.s32 1, %v278
        %v280 = vrot.slane %v241, %v279
        %v281 = vmul.f32 %v280, %v245
        %v282 = vmul.f32 %v280, %v246
        %v283 = vadd.f32 %v275, %v281
        %v284 = vadd.f32 %v276, %v282
        %285 = vst [vmem:[%s112] sm:$0xff] %v283
        %286 = vst [vmem:[%s112 + $0x8] sm:$0x3] %v284
        %v287 = vlaneseq
        %v288 = vshrl.u32 %v287, 7
        %v289 = vsub.s32 2, %v288
        %v290 = vrot.slane %v204, %v289
        %v291 = vmul.f32 %v290, %v229
        %v292 = vmul.f32 %v290, %v230
        %v293 = vsub.f32 %v123, %v291
        %v294 = vsub.f32 %v124, %v292
        %v295 = vlaneseq
        %v296 = vshrl.u32 %v295, 7
        %v297 = vsub.s32 2, %v296
        %v298 = vrot.slane %v241, %v297
        %v299 = vmul.f32 %v298, %v245
        %v300 = vmul.f32 %v298, %v246
        %v301 = vadd.f32 %v293, %v299
        %v302 = vadd.f32 %v294, %v300
        %303 = vst [vmem:[%s122] sm:$0xff] %v301
        %304 = vst [vmem:[%s122 + $0x8] sm:$0x3] %v302
        %v305 = vlaneseq
        %v306 = vshrl.u32 %v305, 7
        %v307 = vsub.s32 3, %v306
        %v308 = vrot.slane %v204, %v307
        %v309 = vmul.f32 %v308, %v229
        %v310 = vmul.f32 %v308, %v230
        %v311 = vsub.f32 %v133, %v309
        %v312 = vsub.f32 %v134, %v310
        %v313 = vlaneseq
        %v314 = vshrl.u32 %v313, 7
        %v315 = vsub.s32 3, %v314
        %v316 = vrot.slane %v241, %v315
        %v317 = vmul.f32 %v316, %v245
        %v318 = vmul.f32 %v316, %v246
        %v319 = vadd.f32 %v311, %v317
        %v320 = vadd.f32 %v312, %v318
        %321 = vst [vmem:[%s132] sm:$0xff] %v319
        %322 = vst [vmem:[%s132 + $0x8] sm:$0x3] %v320
        %v323 = vlaneseq
        %v324 = vshrl.u32 %v323, 7
        %v325 = vsub.s32 4, %v324
        %v326 = vrot.slane %v204, %v325
        %v327 = vmul.f32 %v326, %v229
        %v328 = vmul.f32 %v326, %v230
        %v329 = vsub.f32 %v143, %v327
        %v330 = vsub.f32 %v144, %v328
        %v331 = vlaneseq
        %v332 = vshrl.u32 %v331, 7
        %v333 = vsub.s32 4, %v332
        %v334 = vrot.slane %v241, %v333
        %v335 = vmul.f32 %v334, %v245
        %v336 = vmul.f32 %v334, %v246
        %v337 = vadd.f32 %v329, %v335
        %v338 = vadd.f32 %v330, %v336
        %339 = vst [vmem:[%s142] sm:$0xff] %v337
        %340 = vst [vmem:[%s142 + $0x8] sm:$0x3] %v338
        %v341 = vlaneseq
        %v342 = vshrl.u32 %v341, 7
        %v343 = vsub.s32 5, %v342
        %v344 = vrot.slane %v204, %v343
        %v345 = vmul.f32 %v344, %v229
        %v346 = vmul.f32 %v344, %v230
        %v347 = vsub.f32 %v153, %v345
        %v348 = vsub.f32 %v154, %v346
        %v349 = vlaneseq
        %v350 = vshrl.u32 %v349, 7
        %v351 = vsub.s32 5, %v350
        %v352 = vrot.slane %v241, %v351
        %v353 = vmul.f32 %v352, %v245
        %v354 = vmul.f32 %v352, %v246
        %v355 = vadd.f32 %v347, %v353
        %v356 = vadd.f32 %v348, %v354
        %357 = vst [vmem:[%s152] sm:$0xff] %v355
        %358 = vst [vmem:[%s152 + $0x8] sm:$0x3] %v356
        %v359 = vlaneseq
        %v360 = vshrl.u32 %v359, 7
        %v361 = vsub.s32 6, %v360
        %v362 = vrot.slane %v204, %v361
        %v363 = vmul.f32 %v362, %v229
        %v364 = vmul.f32 %v362, %v230
        %v365 = vsub.f32 %v163, %v363
        %v366 = vsub.f32 %v164, %v364
        %v367 = vlaneseq
        %v368 = vshrl.u32 %v367, 7
        %v369 = vsub.s32 6, %v368
        %v370 = vrot.slane %v241, %v369
        %v371 = vmul.f32 %v370, %v245
        %v372 = vmul.f32 %v370, %v246
        %v373 = vadd.f32 %v365, %v371
        %v374 = vadd.f32 %v366, %v372
        %375 = vst [vmem:[%s162] sm:$0xff] %v373
        %376 = vst [vmem:[%s162 + $0x8] sm:$0x3] %v374
        %v377 = vlaneseq
        %v378 = vshrl.u32 %v377, 7
        %v379 = vsub.s32 7, %v378
        %v380 = vrot.slane %v204, %v379
        %v381 = vmul.f32 %v380, %v229
        %v382 = vmul.f32 %v380, %v230
        %v383 = vsub.f32 %v173, %v381
        %v384 = vsub.f32 %v174, %v382
        %v385 = vlaneseq
        %v386 = vshrl.u32 %v385, 7
        %v387 = vsub.s32 7, %v386
        %v388 = vrot.slane %v241, %v387
        %v389 = vmul.f32 %v388, %v245
        %v390 = vmul.f32 %v388, %v246
        %v391 = vadd.f32 %v383, %v389
        %v392 = vadd.f32 %v384, %v390
        %393 = vst [vmem:[%s172] sm:$0xff] %v391
        %394 = vst [vmem:[%s172 + $0x8] sm:$0x3] %v392
        %v395 = vlaneseq
        %v396 = vshrl.u32 %v395, 7
        %v397 = vsub.s32 0, %v396
        %v398 = vrot.slane %v205, %v397
        %v399 = vmul.f32 %v398, %v229
        %v400 = vmul.f32 %v398, %v230
        %v401 = vsub.f32 %v183, %v399
        %v402 = vsub.f32 %v184, %v400
        %v403 = vlaneseq
        %v404 = vshrl.u32 %v403, 7
        %v405 = vsub.s32 0, %v404
        %v406 = vrot.slane %v242, %v405
        %v407 = vmul.f32 %v406, %v245
        %v408 = vmul.f32 %v406, %v246
        %v409 = vadd.f32 %v401, %v407
        %v410 = vadd.f32 %v402, %v408
        %411 = vst [vmem:[%s182] sm:$0xff] %v409
        %412 = vst [vmem:[%s182 + $0x8] sm:$0x3] %v410
        %v413 = vlaneseq
        %v414 = vshrl.u32 %v413, 7
        %v415 = vsub.s32 1, %v414
        %v416 = vrot.slane %v205, %v415
        %v417 = vmul.f32 %v416, %v229
        %v418 = vmul.f32 %v416, %v230
        %v419 = vsub.f32 %v193, %v417
        %v420 = vsub.f32 %v194, %v418
        %v421 = vlaneseq
        %v422 = vshrl.u32 %v421, 7
        %v423 = vsub.s32 1, %v422
        %v424 = vrot.slane %v242, %v423
        %v425 = vmul.f32 %v424, %v245
        %v426 = vmul.f32 %v424, %v246
        %v427 = vadd.f32 %v419, %v425
        %v428 = vadd.f32 %v420, %v426
        %429 = vst [vmem:[%s192] sm:$0xff] %v427
        %430 = vst [vmem:[%s192 + $0x8] sm:$0x3] %v428
        %431 = vst [vmem:[%s203] sm:$0xff] %v249
        %432 = vst [vmem:[%s203 + $0x8] sm:$0x3] %v250
        %p433 = scmp.eq.s32.totalorder %s83, 1
        // Predicated region
        $region32: #{tpu_custom_call.1} parent=28 // pred_check
          %p434 = pneg %p433
        $region33: #{tpu_custom_call.1} parent=28 // pred_check_branch
          %436 = sbr.rel (%p434) target = $region35
        $region34: #{tpu_custom_call.1} parent=28 // pred_region
          %s437 = sld [smem:[#allocation3 + %s103]]
          %v438 = vstv %s437
          %v439 = vmul.f32 %v438, %v200
          %v440 = vadd.f32 %v439, 0.0
          %s441 = sld [smem:[#allocation3 + %s115]]
          %v442 = vstv %s441
          %v443 = vmul.f32 %v442, %v200
          %v445 = vrot.slane %v443, 1
          %v447 = vadd.f32 %v440, %v445
          %s448 = sld [smem:[#allocation3 + %s125]]
          %v449 = vstv %s448
          %v450 = vmul.f32 %v449, %v200
          %v452 = vrot.slane %v450, 2
          %v454 = vadd.f32 %v447, %v452
          %s455 = sld [smem:[#allocation3 + %s135]]
          %v456 = vstv %s455
          %v457 = vmul.f32 %v456, %v200
          %v459 = vrot.slane %v457, 3
          %v461 = vadd.f32 %v454, %v459
          %s462 = sld [smem:[#allocation3 + %s145]]
          %v463 = vstv %s462
          %v464 = vmul.f32 %v463, %v200
          %v466 = vrot.slane %v464, 4
          %v468 = vadd.f32 %v461, %v466
          %s469 = sld [smem:[#allocation3 + %s155]]
          %v470 = vstv %s469
          %v471 = vmul.f32 %v470, %v200
          %v473 = vrot.slane %v471, 5
          %v475 = vadd.f32 %v468, %v473
          %s476 = sld [smem:[#allocation3 + %s165]]
          %v477 = vstv %s476
          %v478 = vmul.f32 %v477, %v200
          %v480 = vrot.slane %v478, 6
          %v482 = vadd.f32 %v475, %v480
          %s483 = sld [smem:[#allocation3 + %s175]]
          %v484 = vstv %s483
          %v485 = vmul.f32 %v484, %v200
          %v487 = vrot.slane %v485, 7
          %v489 = vadd.f32 %v482, %v487
          %s490 = sld [smem:[#allocation3 + %s185]]
          %v491 = vstv %s490
          %v492 = vmul.f32 %v491, %v201
          %v493 = vadd.f32 %v489, %v492
          %s494 = sld [smem:[#allocation3 + %s195]]
          %v495 = vstv %s494
          %v496 = vmul.f32 %v495, %v201
          %v498 = vrot.slane %v496, 1
          %v500 = vadd.f32 %v493, %v498
          %v501 = vadd.f32 %v500, 1.0
          %v502 = vld [vmem:[#allocation8] sm:$0xff]
          %v503 = vld [vmem:[#allocation8 + $0x8] sm:$0x3]
          %v504 = vlaneseq
          %v505 = vshrl.u32 %v504, 7
          %v506 = vsub.s32 0, %v505
          %v507 = vrot.slane %v501, %v506
          %v508 = vmul.f32 %v99, %v507
          %v509 = vmul.f32 %v100, %v507
          %v510 = vadd.f32 %v502, %v508
          %v511 = vadd.f32 %v503, %v509
          %512 = vst [vmem:[#allocation8] sm:$0xff] %v510
          %513 = vst [vmem:[#allocation8 + $0x8] sm:$0x3] %v511
        $region35: #{tpu_custom_call.1} parent=28 // pred_fallthru
          _
      $region29: #{tpu_custom_call.1} parent=21 // loop_footer
        %s93 = sadd.s32 1, %s89
      $region30: #{tpu_custom_call.1} parent=21 // loop_footer_branch
        %88 = sbr.rel target = $region26
      $region31: #{tpu_custom_call.1} parent=21 // loop_exit
        _
    $region22: #{tpu_custom_call.1} parent=1 // loop_footer
      %s87 = sadd.s32 1, %s83
    $region23: #{tpu_custom_call.1} parent=1 // loop_footer_branch
      %82 = sbr.rel target = $region19
    $region24: #{tpu_custom_call.1} parent=1 // loop_exit
      _
    // Predicated region
    $region36: #{tpu_custom_call.1} parent=1 // pred_check
      _
    $region37: #{tpu_custom_call.1} parent=1 // pred_check_branch
      %515 = sbr.rel (0) target = $region39
    $region38: #{tpu_custom_call.1} parent=1 // pred_region
      %s517 = ssub.s32 256, 256
      %518 = vsyncadd [#allocation5], %s517
      %s519 = sshll.u32 [#allocation8], 4
      %s520 = int_to_ptr.vmem [resolvable:$true] %s519
      %525 = dma.vmem_to_hbm [thread:$0]  %s520, 256, %s2, [#allocation5], 128, 128, 8
    $region39: #{tpu_custom_call.1} parent=1 // pred_fallthru
      _
    // Predicated region
    $region40: #{tpu_custom_call.1} parent=1 // pred_check
      _
    $region41: #{tpu_custom_call.1} parent=1 // pred_check_branch
      %527 = sbr.rel (0) target = $region43
    $region42: #{tpu_custom_call.1} parent=1 // pred_region
      %528 = dma.done [#allocation5], 256
    $region43: #{tpu_custom_call.1} parent=1 // pred_fallthru
      _
    %529 = vsyncpa [#allocation4], 1
    %530 = vsyncpa [#allocation5], 1
    %531 = vsyncpa [#allocation6], 1

</llo_original>
